<compile_context>
chip_gen: v5e
topology: v5e:2x2
jax: 0.10.0
libtpu: 0.0.40
codegen_flags: <defaults>
</compile_context>

<pallas_src>
import functools
import math

import jax
import jax.numpy as jnp
from jax.experimental import pallas as pl
from jax.experimental.pallas import tpu as pltpu


def _cls_head_kernel(x_ref, w1_ref, b1_ref, w2_ref, b2_ref, o_ref):
    # x_ref:  (bm, Cin)   f32
    # w1_ref: (Cin, H)    f32   (already transposed from torch (H, Cin))
    # b1_ref: (1, H)      f32
    # w2_ref: (H, Cout)   f32
    # b2_ref: (1, Cout)   f32
    # o_ref:  (bm, Cout)  f32
    x = x_ref[...]

    # Linear 1 + ReLU (MXU + VPU)
    h = jnp.dot(x, w1_ref[...], preferred_element_type=jnp.float32) + b1_ref[...]
    h = jnp.maximum(h, 0.0)

    # Linear 2 (MXU)
    logits = jnp.dot(h, w2_ref[...], preferred_element_type=jnp.float32) + b2_ref[...]

    # Stable softmax along the last axis (VPU + EUP for exp)
    m = jnp.max(logits, axis=-1, keepdims=True)
    p = jnp.exp(logits - m)
    s = jnp.sum(p, axis=-1, keepdims=True)
    o_ref[...] = (p / s).astype(o_ref.dtype)


def classification_head(x, w1, b1, w2, b2, *, block_rows=1024):
    """Fused ClassificationHead forward.

    x : (..., in_channels)
    w1: (hidden_channels, in_channels)   torch nn.Linear weight layout
    b1: (hidden_channels,)
    w2: (out_channels, hidden_channels)
    b2: (out_channels,)
    returns: (..., out_channels) softmax probabilities, float32
    """
    in_channels = x.shape[-1]
    hidden_channels, in_w1 = w1.shape
    out_channels, hidden_w2 = w2.shape
    assert in_w1 == in_channels and hidden_w2 == hidden_channels

    lead = x.shape[:-1]
    n = math.prod(lead) if lead else 1
    x2 = x.reshape(n, in_channels).astype(jnp.float32)

    # Choose the row-block size: large for throughput, but never bigger than
    # the (sublane-aligned) row count so tiny inputs are not over-padded.
    block_rows = max(8, min(block_rows, pl.cdiv(n, 8) * 8))
    n_pad = pl.cdiv(n, block_rows) * block_rows
    if n_pad != n:
        x2 = jnp.pad(x2, ((0, n_pad - n), (0, 0)))

    w1t = jnp.asarray(w1, jnp.float32).T                     # (Cin, H)
    w2t = jnp.asarray(w2, jnp.float32).T                     # (H, Cout)
    b1r = jnp.asarray(b1, jnp.float32).reshape(1, hidden_channels)
    b2r = jnp.asarray(b2, jnp.float32).reshape(1, out_channels)

    out = pl.pallas_call(
        _cls_head_kernel,
        out_shape=jax.ShapeDtypeStruct((n_pad, out_channels), jnp.float32),
        grid_spec=pltpu.PrefetchScalarGridSpec(
            num_scalar_prefetch=0,
            grid=(n_pad // block_rows,),
            in_specs=[
                pl.BlockSpec((block_rows, in_channels), lambda i: (i, 0)),
                pl.BlockSpec((in_channels, hidden_channels), lambda i: (0, 0)),
                pl.BlockSpec((1, hidden_channels), lambda i: (0, 0)),
                pl.BlockSpec((hidden_channels, out_channels), lambda i: (0, 0)),
                pl.BlockSpec((1, out_channels), lambda i: (0, 0)),
            ],
            out_specs=pl.BlockSpec((block_rows, out_channels), lambda i: (i, 0)),
        ),
        compiler_params=pltpu.CompilerParams(
            dimension_semantics=("parallel",)),
    )(x2, w1t, b1r, w2t, b2r)

    out = out[:n]
    return out.reshape(*lead, out_channels)


def classification_head_ref(x, w1, b1, w2, b2):
    """Pure-JAX reference mirroring the PyTorch forward."""
    xf = x.astype(jnp.float32)
    h = jnp.maximum(xf @ w1.T.astype(jnp.float32) + b1.astype(jnp.float32), 0.0)
    logits = h @ w2.T.astype(jnp.float32) + b2.astype(jnp.float32)
    return jax.nn.softmax(logits, axis=-1)


if __name__ == "__main__":
    # Small module hyperparameters consistent with the forward:
    in_channels = 32
    hidden_channels = 64
    out_channels = 16

    key = jax.random.PRNGKey(0)
    kx, kw1, kb1, kw2, kb2 = jax.random.split(key, 5)

    # Input with leading dims (batch=2, seq=8) -> 16 flattened rows.
    x = jax.random.normal(kx, (2, 8, in_channels), dtype=jnp.float32)

    # Deterministic "nn.Linear" parameters (torch layout: (out, in)).
    w1 = jax.random.normal(kw1, (hidden_channels, in_channels), jnp.float32) * 0.1
    b1 = jax.random.normal(kb1, (hidden_channels,), jnp.float32) * 0.1
    w2 = jax.random.normal(kw2, (out_channels, hidden_channels), jnp.float32) * 0.1
    b2 = jax.random.normal(kb2, (out_channels,), jnp.float32) * 0.1

    out = classification_head(x, w1, b1, w2, b2)
    out = jax.block_until_ready(out)

    ref = classification_head_ref(x, w1, b1, w2, b2)
    assert out.shape == (2, 8, out_channels)
    assert jnp.allclose(out, ref, atol=1e-5, rtol=1e-5), "mismatch vs reference"
    # softmax rows must sum to 1
    assert jnp.allclose(jnp.sum(out, axis=-1), 1.0, atol=1e-5)

    print("KERNEL_OK")
</pallas_src>

<mosaic_0001>
module attributes {stable_mosaic.version = 11 : i64} {
  func.func @_cls_head_kernel(%arg0: i32, %arg1: memref<16x32xf32, #tpu.memory_space<vmem>>, %arg2: memref<32x64xf32, #tpu.memory_space<vmem>>, %arg3: memref<1x64xf32, #tpu.memory_space<vmem>>, %arg4: memref<64x16xf32, #tpu.memory_space<vmem>>, %arg5: memref<1x16xf32, #tpu.memory_space<vmem>>, %arg6: memref<16x16xf32, #tpu.memory_space<vmem>>) attributes {dimension_semantics = [#tpu.dimension_semantics<parallel>], iteration_bounds = array<i64: 1>, scalar_prefetch = 0 : i64, scratch_operands = 0 : i64, tpu.core_type = #tpu.core_type<tc>, window_params = [{transform_indices = @transform_0, window_bounds = array<i64: 16, 32>}, {pipeline_mode = #tpu.pipeline_mode<synchronous>, transform_indices = @transform_1, window_bounds = array<i64: 32, 64>}, {pipeline_mode = #tpu.pipeline_mode<synchronous>, transform_indices = @transform_2, window_bounds = array<i64: 1, 64>}, {pipeline_mode = #tpu.pipeline_mode<synchronous>, transform_indices = @transform_3, window_bounds = array<i64: 64, 16>}, {pipeline_mode = #tpu.pipeline_mode<synchronous>, transform_indices = @transform_4, window_bounds = array<i64: 1, 16>}, {transform_indices = @transform_5, window_bounds = array<i64: 16, 16>}]} {
    %c0 = arith.constant 0 : index
    %c0_0 = arith.constant 0 : index
    %0 = vector.load %arg1[%c0, %c0_0] : memref<16x32xf32, #tpu.memory_space<vmem>>, vector<16x32xf32>
    %c0_1 = arith.constant 0 : index
    %c0_2 = arith.constant 0 : index
    %1 = vector.load %arg2[%c0_1, %c0_2] : memref<32x64xf32, #tpu.memory_space<vmem>>, vector<32x64xf32>
    %cst = arith.constant dense<0.000000e+00> : vector<16x64xf32>
    %2 = tpu.matmul %0, %1, %cst {dimension_numbers = #tpu.dot_dimension_numbers<[1], [0], [0], [1], [0, 0, 1, 1], [], []>} : vector<16x32xf32>, vector<32x64xf32>, vector<16x64xf32> -> vector<16x64xf32>
    %c0_3 = arith.constant 0 : index
    %c0_4 = arith.constant 0 : index
    %3 = vector.load %arg3[%c0_3, %c0_4] : memref<1x64xf32, #tpu.memory_space<vmem>>, vector<1x64xf32>
    %4 = vector.broadcast %3 : vector<1x64xf32> to vector<16x64xf32>
    %5 = arith.addf %2, %4 : vector<16x64xf32>
    %cst_5 = arith.constant 0.000000e+00 : f32
    %6 = vector.broadcast %cst_5 : f32 to vector<16x64xf32>
    %7 = arith.maximumf %5, %6 : vector<16x64xf32>
    %c0_6 = arith.constant 0 : index
    %c0_7 = arith.constant 0 : index
    %8 = vector.load %arg4[%c0_6, %c0_7] : memref<64x16xf32, #tpu.memory_space<vmem>>, vector<64x16xf32>
    %cst_8 = arith.constant dense<0.000000e+00> : vector<16x16xf32>
    %9 = tpu.matmul %7, %8, %cst_8 {dimension_numbers = #tpu.dot_dimension_numbers<[1], [0], [0], [1], [0, 0, 1, 1], [], []>} : vector<16x64xf32>, vector<64x16xf32>, vector<16x16xf32> -> vector<16x16xf32>
    %c0_9 = arith.constant 0 : index
    %c0_10 = arith.constant 0 : index
    %10 = vector.load %arg5[%c0_9, %c0_10] : memref<1x16xf32, #tpu.memory_space<vmem>>, vector<1x16xf32>
    %11 = vector.broadcast %10 : vector<1x16xf32> to vector<16x16xf32>
    %12 = arith.addf %9, %11 : vector<16x16xf32>
    %cst_11 = arith.constant dense<0xFF800000> : vector<16xf32>
    %13 = vector.multi_reduction <maximumf>, %12, %cst_11 [1] : vector<16x16xf32> to vector<16xf32>
    %14 = vector.shape_cast %13 : vector<16xf32> to vector<16x1xf32>
    %15 = vector.broadcast %14 : vector<16x1xf32> to vector<16x16xf32>
    %16 = arith.subf %12, %15 : vector<16x16xf32>
    %17 = math.exp %16 : vector<16x16xf32>
    %cst_12 = arith.constant dense<0.000000e+00> : vector<16xf32>
    %18 = vector.multi_reduction <add>, %17, %cst_12 [1] : vector<16x16xf32> to vector<16xf32>
    %19 = vector.shape_cast %18 : vector<16xf32> to vector<16x1xf32>
    %20 = vector.broadcast %19 : vector<16x1xf32> to vector<16x16xf32>
    %21 = arith.divf %17, %20 : vector<16x16xf32>
    %c0_13 = arith.constant 0 : index
    %c0_14 = arith.constant 0 : index
    %22 = vector.load %arg6[%c0_13, %c0_14] : memref<16x16xf32, #tpu.memory_space<vmem>>, vector<16x16xf32>
    tpu.vector_store %arg6[%c0_13, %c0_14], %21 {strides = array<i32>} : memref<16x16xf32, #tpu.memory_space<vmem>>, vector<16x16xf32>,
    return
  }
  func.func @transform_0(%arg0: i32) -> (i32, i32) {
    %c0_i32 = arith.constant 0 : i32
    %c0_i32_0 = arith.constant 0 : i32
    return %arg0, %c0_i32 : i32, i32
  }
  func.func @transform_1(%arg0: i32) -> (i32, i32) {
    %c0_i32 = arith.constant 0 : i32
    %c0_i32_0 = arith.constant 0 : i32
    %c0_i32_1 = arith.constant 0 : i32
    return %c0_i32, %c0_i32_0 : i32, i32
  }
  func.func @transform_2(%arg0: i32) -> (i32, i32) {
    %c0_i32 = arith.constant 0 : i32
    %c0_i32_0 = arith.constant 0 : i32
    %c0_i32_1 = arith.constant 0 : i32
    return %c0_i32, %c0_i32_0 : i32, i32
  }
  func.func @transform_3(%arg0: i32) -> (i32, i32) {
    %c0_i32 = arith.constant 0 : i32
    %c0_i32_0 = arith.constant 0 : i32
    %c0_i32_1 = arith.constant 0 : i32
    return %c0_i32, %c0_i32_0 : i32, i32
  }
  func.func @transform_4(%arg0: i32) -> (i32, i32) {
    %c0_i32 = arith.constant 0 : i32
    %c0_i32_0 = arith.constant 0 : i32
    %c0_i32_1 = arith.constant 0 : i32
    return %c0_i32, %c0_i32_0 : i32, i32
  }
  func.func @transform_5(%arg0: i32) -> (i32, i32) {
    %c0_i32 = arith.constant 0 : i32
    %c0_i32_0 = arith.constant 0 : i32
    return %arg0, %c0_i32 : i32, i32
  }
}

</mosaic_0001>

<llo_original>
// kernel: tpu_custom_call.1
$region0: #{tpu_custom_call.1}
  #allocation0 [shape = 'u32[]', space=smem, size = 0x4, offset = 0x4, fixed_abs, tag = 'smem constant byte address 0x4 - core index']
  #allocation1 [shape = 'u32[72,128]{1,0:T(1,128)}', space=vmem, size = 0x9000, scoped, tag = 'internal scratch']
  %s0 = inlined_call_operand.vmem [shape: f32[16,32], index: 0, kind: input, shape index: {}]
  %s1 = inlined_call_operand.vmem [shape: f32[32,64], index: 1, kind: input, shape index: {}]
  %s2 = inlined_call_operand.vmem [shape: f32[1,64], index: 2, kind: input, shape index: {}]
  %s3 = inlined_call_operand.vmem [shape: f32[64,16], index: 3, kind: input, shape index: {}]
  %s4 = inlined_call_operand.vmem [shape: f32[1,16], index: 4, kind: input, shape index: {}]
  %s5 = inlined_call_operand.hbm [shape: f32[16,16], index: 5, kind: output, shape index: {}]
  %s6 = sld [smem:[#allocation0]]
  $region30: #{tpu_custom_call.1} parent=0
    _
  %s8 = ssub.s32 1, %s6
  %s9 = scalar_select 0, %s8, %s6
  $region1: #{tpu_custom_call.1} parent=0
    #allocation2 [shape = 'u8[8192]{0}', space=vmem, size = 0x2000, scoped, tag = 'output window, operand 0, single buffered']
    #allocation3 [shape = 's32[1]{0}', space=sflag, size = 0x4, scoped, tag = 'scoped memory for tpu_custom_call.1']
    %10 = vsyncpa [#allocation3], 0
    // Predicated region
    $region2: #{tpu_custom_call.1} parent=1 // pred_check
      _
    $region3: #{tpu_custom_call.1} parent=1 // pred_check_branch
      %12 = sbr.rel (0) target = $region5
    $region4: #{tpu_custom_call.1} parent=1 // pred_region
      _
    $region5: #{tpu_custom_call.1} parent=1 // pred_fallthru
      _
    // Predicated region
    $region6: #{tpu_custom_call.1} parent=1 // pred_check
      _
    $region7: #{tpu_custom_call.1} parent=1 // pred_check_branch
      %14 = sbr.rel (0) target = $region9
    $region8: #{tpu_custom_call.1} parent=1 // pred_region
      _
    $region9: #{tpu_custom_call.1} parent=1 // pred_fallthru
      _
    // Predicated region
    $region10: #{tpu_custom_call.1} parent=1 // pred_check
      _
    $region11: #{tpu_custom_call.1} parent=1 // pred_check_branch
      %16 = sbr.rel (0) target = $region13
    $region12: #{tpu_custom_call.1} parent=1 // pred_region
      _
    $region13: #{tpu_custom_call.1} parent=1 // pred_fallthru
      _
    // Predicated region
    $region14: #{tpu_custom_call.1} parent=1 // pred_check
      _
    $region15: #{tpu_custom_call.1} parent=1 // pred_check_branch
      %18 = sbr.rel (0) target = $region17
    $region16: #{tpu_custom_call.1} parent=1 // pred_region
      _
    $region17: #{tpu_custom_call.1} parent=1 // pred_fallthru
      _
    // Predicated region
    $region18: #{tpu_custom_call.1} parent=1 // pred_check
      _
    $region19: #{tpu_custom_call.1} parent=1 // pred_check_branch
      %20 = sbr.rel (0) target = $region21
    $region20: #{tpu_custom_call.1} parent=1 // pred_region
      _
    $region21: #{tpu_custom_call.1} parent=1 // pred_fallthru
      _
    %v21 = vld [vmem:[%s0] sm:$0xff]
    %v22 = vld [vmem:[%s0 + $0x8] sm:$0xff]
    %v23 = vld [vmem:[%s1] sm:$0xff]
    %v24 = vld [vmem:[%s1 + $0x8] sm:$0xff]
    %v25 = vld [vmem:[%s1 + $0x10] sm:$0xff]
    %v26 = vld [vmem:[%s1 + $0x18] sm:$0xff]
    %v27 = vld [vmem:[%s2] sm:$0x1]
    %v29 = vperm.slane %v27, 0
    %vm31 = vcmask 261120
    %v33 = vsel %vm31, %v21, 0
    %v36 = vsel %vm31, %v22, 0
    %38 = vmatpush.msra.mxu0 0.0
    %39 = vmatpush.msra.mxu0 0.0
    %40 = vmatpush.msra.mxu0 0.0
    %41 = vmatpush.msra.mxu0 0.0
    %42 = vmatpush.msra.mxu0 0.0
    %43 = vmatpush.msra.mxu0 0.0
    %44 = vmatpush.msra.mxu0 0.0
    %45 = vmatpush.msra.mxu0 0.0
    %46 = vmatpush.msra.mxu0 0.0
    %47 = vmatpush.msra.mxu0 0.0
    %48 = vmatpush.msra.mxu0 0.0
    %49 = vmatpush.msra.mxu0 0.0
    %50 = vmatpush.msra.mxu0 %v26
    %51 = vmatpush.msra.mxu0 %v25
    %52 = vmatpush.msra.mxu0 %v24
    %53 = vmatpush.msra.mxu0 %v23
    %54 = vmatmul.f32.gmra.mxu0 %v33
    %v55 = vpop.f32.mrf.mxu0
    %v56 = vadd.f32 %v29, %v55
    %57 = vmatmul.f32.gmra.mxu0 %v36
    %v58 = vpop.f32.mrf.mxu0
    %v59 = vadd.f32 %v29, %v58
    %60 = vdwg.mxu0
    %v61 = vmax.f32 %v56, 0.0
    %v62 = vmax.f32 %v59, 0.0
    %v63 = vld [vmem:[%s3] sm:$0xff]
    %v64 = vld [vmem:[%s3 + $0x8] sm:$0xff]
    %v65 = vld [vmem:[%s3 + $0x10] sm:$0xff]
    %v66 = vld [vmem:[%s3 + $0x18] sm:$0xff]
    %v67 = vld [vmem:[%s3 + $0x20] sm:$0xff]
    %v68 = vld [vmem:[%s3 + $0x28] sm:$0xff]
    %v69 = vld [vmem:[%s3 + $0x30] sm:$0xff]
    %v70 = vld [vmem:[%s3 + $0x38] sm:$0xff]
    %v71 = vld [vmem:[%s4] sm:$0x1]
    %v73 = vperm.slane %v71, 0
    %vm75 = vcmask 523264
    %v77 = vsel %vm75, %v61, 0
    %v80 = vsel %vm75, %v62, 0
    %82 = vmatpush.msra.mxu0 0.0
    %83 = vmatpush.msra.mxu0 0.0
    %84 = vmatpush.msra.mxu0 0.0
    %85 = vmatpush.msra.mxu0 0.0
    %86 = vmatpush.msra.mxu0 0.0
    %87 = vmatpush.msra.mxu0 0.0
    %88 = vmatpush.msra.mxu0 0.0
    %89 = vmatpush.msra.mxu0 0.0
    %90 = vmatpush.msra.mxu0 %v70
    %91 = vmatpush.msra.mxu0 %v69
    %92 = vmatpush.msra.mxu0 %v68
    %93 = vmatpush.msra.mxu0 %v67
    %94 = vmatpush.msra.mxu0 %v66
    %95 = vmatpush.msra.mxu0 %v65
    %96 = vmatpush.msra.mxu0 %v64
    %97 = vmatpush.msra.mxu0 %v63
    %98 = vmatmul.f32.gmra.mxu0 %v77
    %v99 = vpop.f32.mrf.mxu0
    %v100 = vadd.f32 %v73, %v99
    %101 = vmatmul.f32.gmra.mxu0 %v80
    %v102 = vpop.f32.mrf.mxu0
    %v103 = vadd.f32 %v73, %v102
    %104 = vdwg.mxu0
    %vm105 = vcmask 130048
    %v106 = vsel %vm105, %v100, -inf
    %107 = vmax.xlane.f32.xlu0 %v106
    %v108 = vpop.xlane.xlu0 %107
    %v109 = vsel %vm105, %v103, -inf
    %110 = vmax.xlane.f32.xlu0 %v109
    %v111 = vpop.xlane.xlu0 %110
    %v112 = vsub.f32 %v100, %v108
    %v113 = vsub.f32 %v103, %v111
    %v114 = vmul.f32 %v112, 1.442695
    %v115 = vpow.pop %v114
    %v116 = vmul.f32 %v113, 1.442695
    %v117 = vpow.pop %v116
    %v118 = vsel %vm105, %v115, 0.0
    %119 = vadd.xlane.f32.xlu0 %v118
    %v120 = vpop.xlane.xlu0 %119
    %v121 = vsel %vm105, %v117, 0.0
    %122 = vadd.xlane.f32.xlu0 %v121
    %v123 = vpop.xlane.xlu0 %122
    %v124 = vrcp.pop %v120
    %v125 = vmul.f32 %v120, %v124
    %v126 = vsub.f32 1.0, %v125
    %v127 = vmul.f32 %v124, %v126
    %v128 = vadd.f32 %v124, %v127
    %vm129 = vweird.f32 %v120
    %vm130 = vweird.f32 %v124
    %vm131 = vmor %vm129, %vm130
    %v132 = vsel %vm131, %v124, %v128
    %v133 = vand.u32 2147483647, %v120
    %vm134 = vcmp.eq.f32.partialorder %v133, 8.507059e+37
    %v135 = vand.u32 %v120, 2147483648
    %v136 = vor.u32 1.1754944e-38, %v135
    %v137 = vsel %vm134, %v136, %v132
    %v138 = vmul.f32 %v115, %v137
    %v139 = vrcp.pop %v123
    %v140 = vmul.f32 %v123, %v139
    %v141 = vsub.f32 1.0, %v140
    %v142 = vmul.f32 %v139, %v141
    %v143 = vadd.f32 %v139, %v142
    %vm144 = vweird.f32 %v123
    %vm145 = vweird.f32 %v139
    %vm146 = vmor %vm144, %vm145
    %v147 = vsel %vm146, %v139, %v143
    %v148 = vand.u32 2147483647, %v123
    %vm149 = vcmp.eq.f32.partialorder %v148, 8.507059e+37
    %v150 = vand.u32 %v123, 2147483648
    %v151 = vor.u32 1.1754944e-38, %v150
    %v152 = vsel %vm149, %v151, %v147
    %v153 = vmul.f32 %v117, %v152
    %154 = vst.msk [vmem:[#allocation2] sm:$0xff] %vm105, %v138
    %155 = vst.msk [vmem:[#allocation2 + $0x8] sm:$0xff] %vm105, %v153
    // Predicated region
    $region22: #{tpu_custom_call.1} parent=1 // pred_check
      _
    $region23: #{tpu_custom_call.1} parent=1 // pred_check_branch
      %157 = sbr.rel (0) target = $region25
    $region24: #{tpu_custom_call.1} parent=1 // pred_region
      %159 = vsyncadd [#allocation3], 0
      %s160 = sshll.u32 [#allocation2], 4
      %s161 = int_to_ptr.vmem [resolvable:$true] %s160
      %s162 = sshll.u32 %s5, 4
      %s163 = int_to_ptr.hbm [resolvable:$true] %s162
      %168 = dma.vmem_to_hbm [thread:$0]  %s161, 256, %s163, [#allocation3], 128, 128, 8
    $region25: #{tpu_custom_call.1} parent=1 // pred_fallthru
      _
    // Predicated region
    $region26: #{tpu_custom_call.1} parent=1 // pred_check
      _
    $region27: #{tpu_custom_call.1} parent=1 // pred_check_branch
      %170 = sbr.rel (0) target = $region29
    $region28: #{tpu_custom_call.1} parent=1 // pred_region
      %172 = dma.done [#allocation3], 256
    $region29: #{tpu_custom_call.1} parent=1 // pred_fallthru
      _
    %173 = vsyncpa [#allocation3], 1

</llo_original>
